<compile_context>
chip_gen: v6e
topology: v6e:2x2x1
jax: 0.10.0
libtpu: 0.0.40
codegen_flags: <defaults>
</compile_context>

<pallas_src>
import functools

import jax
import jax.numpy as jnp
from jax.experimental import pallas as pl
from jax.experimental.pallas import tpu as pltpu

EPS = 1e-12  # torch F.normalize default eps


def _graph_channel_kernel(sw_ref, adj_ref, o_ref, *, tile, n_valid, ragged):
    """sw_ref: (C,) softmax weights in SMEM.
    adj_ref: (N, tile) column tile of one channel (channel dim squeezed).
    o_ref:   (N, tile) output tile, resident accumulator across the channel axis."""
    j = pl.program_id(0)
    c = pl.program_id(1)

    # Per-column squared L2 norm over rows (== dim=1 of the stacked adj).
    sumsq = jnp.sum(jnp.square(adj_ref[...].astype(jnp.float32)),
                    axis=0, keepdims=True)                       # (1, tile)
    # max(sqrt(s), eps) == sqrt(max(s, eps^2)); 1e-24 is a normal f32.
    scale = jax.lax.rsqrt(jnp.maximum(sumsq, EPS * EPS)) * sw_ref[c]

    if ragged:
        # Zero the scale for padded columns of the ragged last tile so no
        # garbage / Inf / NaN reaches the accumulator (the writeback would
        # drop those columns anyway — this just keeps the lanes clean).
        col = jax.lax.broadcasted_iota(jnp.int32, (1, tile), 1) + j * tile
        scale = jnp.where(col < n_valid, scale, 0.0)

    # Second streamed pass over the input tile (no full f32 temporary kept live).
    contrib = adj_ref[...].astype(jnp.float32) * scale

    @pl.when(c == 0)
    def _init():
        o_ref[...] = contrib

    @pl.when(c > 0)
    def _accum():
        o_ref[...] = o_ref[...] + contrib


def _round_down_128(x):
    return (int(x) // 128) * 128


def _vmem_info():
    """Returns (usable_budget_bytes, physical_capacity_bytes), generation-aware."""
    cap = None
    try:
        cap = int(pltpu.get_tpu_info().vmem_capacity_bytes)
    except Exception:
        cap = None
    if not cap or cap <= 0:
        cap = 64 << 20  # conservative fallback: assume a 64 MiB (v7x-class) part
    if cap <= (64 << 20):
        usable = min(cap - (12 << 20), 52 << 20)   # v7x: ~48-52 MiB usable
    else:
        usable = min(cap - (28 << 20), 100 << 20)  # v5e/v6e (128 MiB): ~100 MiB usable
    return max(usable, 24 << 20), cap


def _derive_tile(n, itemsize, budget, requested=None):
    """Pick (column tile width, input buffer count) from the VMEM budget.

    Per-step VMEM ~= n * tile * (in_buffers * itemsize + 2 * 4)
    (multi-buffered input block + double-buffered f32 output block)."""
    if n <= 128:
        return n, 2
    n_floor = max(128, _round_down_128(n))

    def max_tile(nbuf):
        return _round_down_128(budget // (n * (nbuf * itemsize + 8)))

    t3, t2 = max_tile(3), max_tile(2)
    if t3 >= 512:
        tile, in_buffers = t3, 3          # wide tile + triple-buffered input DMA
    else:
        tile, in_buffers = max(t2, 128), 2
    if requested is not None:
        tile = min(tile, max(128, _round_down_128(requested)))
    if n >= 256:
        # Keep >= 2 column tiles so both v7x TensorCores get work (harmless on
        # single-core v5e/v6e: 512- vs 1024-wide tiles measure within ~1%).
        tile = min(tile, max(128, _round_down_128(n // 2)))
    return max(128, min(tile, n_floor)), in_buffers


def _build_call(C, N, tile, in_buffers, in_dtype, vmem_limit, ragged):
    kern = functools.partial(_graph_channel_kernel,
                             tile=tile, n_valid=N, ragged=ragged)
    adj_spec_kwargs = {}
    if in_buffers != 2:
        adj_spec_kwargs["pipeline_mode"] = pl.Buffered(in_buffers)
    itemsize = jnp.dtype(in_dtype).itemsize
    cost = pl.CostEstimate(
        flops=3 * C * N * N,
        transcendentals=C * N,
        bytes_accessed=C * N * N * itemsize + N * N * 4,
    )
    return pl.pallas_call(
        kern,
        out_shape=jax.ShapeDtypeStruct((N, N), jnp.float32),
        grid_spec=pltpu.PrefetchScalarGridSpec(
            num_scalar_prefetch=0,
            grid=(pl.cdiv(N, tile), C),  # (column tiles: parallel, channels: reduction)
            in_specs=[
                pl.BlockSpec(memory_space=pltpu.MemorySpace.SMEM),        # softmax weights (C,)
                pl.BlockSpec((pl.Squeezed(), N, tile),
                             lambda j, c: (c, 0, j), **adj_spec_kwargs),  # one channel's column tile
            ],
            out_specs=pl.BlockSpec((N, tile), lambda j, c: (0, j)),       # constant across c -> accumulator
        ),
        compiler_params=pltpu.CompilerParams(
            dimension_semantics=("parallel", "arbitrary"),
            vmem_limit_bytes=vmem_limit,
        ),
        cost_estimate=cost,
    )


def graph_channel_layer(adj_stack, weight, *, tile_n=None):
    """adj_stack: (C, N, N) float (f32 or bf16); weight: raw (pre-softmax) weights of size C.

    TODO(synk): the row dim is untiled ((N, tile) blocks); extremely large N
    (>~24K in f32 on a 64 MiB v7x part) would need a two-pass column norm with
    row tiling as well.
    """
    C, N, N2 = adj_stack.shape
    assert N == N2, "adjacency matrices must be square"
    itemsize = jnp.dtype(adj_stack.dtype).itemsize

    budget, phys_cap = _vmem_info()
    tile, in_buffers = _derive_tile(N, itemsize, budget, requested=tile_n)
    ragged = (N % tile) != 0

    need = in_buffers * N * tile * itemsize + 2 * N * tile * 4
    vmem_limit = int(min(max(need + (2 << 20), 32 << 20), phys_cap - (4 << 20)))

    # Hoist the tiny channel softmax out of the kernel (C scalars, once per call).
    sw = jax.nn.softmax(weight.reshape(C).astype(jnp.float32))

    try:
        call = _build_call(C, N, tile, in_buffers, adj_stack.dtype, vmem_limit, ragged)
        return call(sw, adj_stack)
    except Exception:
        if in_buffers == 2:
            raise
        # Fall back to the default double-buffered pipeline if Buffered(3) trips lowering.
        call = _build_call(C, N, tile, 2, adj_stack.dtype, vmem_limit, ragged)
        return call(sw, adj_stack)


def _reference(adj_stack, weight):
    """Pure-JAX reference mirroring the PyTorch forward."""
    a = adj_stack.astype(jnp.float32)
    norms = jnp.sqrt(jnp.sum(a * a, axis=1, keepdims=True))
    normalized = a / jnp.maximum(norms, EPS)
    sw = jax.nn.softmax(weight.reshape(-1).astype(jnp.float32))[:, None, None]
    return jnp.sum(normalized * sw, axis=0)


if __name__ == "__main__":
    key = jax.random.PRNGKey(0)

    # C = 4 adjacency matrices of size 256 x 256 (num_channel = 4).
    C, N = 4, 256
    keys = jax.random.split(key, C)
    adj_list = [jax.random.uniform(k, (N, N), dtype=jnp.float32) for k in keys]
    adj_stack = jnp.stack(adj_list)                         # (C, N, N)
    weight = jnp.full((C, 1, 1), 0.1, dtype=jnp.float32)    # nn.Parameter init constant 0.1

    ref = _reference(adj_stack, weight)

    # Auto (budget-derived) tile path.
    out = jax.block_until_ready(graph_channel_layer(adj_stack, weight))
    assert out.shape == (N, N)
    assert jnp.allclose(out, ref, atol=1e-5, rtol=1e-5), "mismatch vs reference (auto tile)"

    # Explicit narrow-tile override (exercises both grid axes / the override path).
    out_small = jax.block_until_ready(graph_channel_layer(adj_stack, weight, tile_n=128))
    assert jnp.allclose(out_small, ref, atol=1e-5, rtol=1e-5), "mismatch vs reference (tile_n=128)"

    # Awkward N (not a multiple of 128): exercises the ragged last tile + scale masking.
    C2, N2 = 3, 160
    keys2 = jax.random.split(jax.random.PRNGKey(1), C2)
    adj2 = jnp.stack([jax.random.uniform(k, (N2, N2), dtype=jnp.float32) for k in keys2])
    w2 = jnp.full((C2, 1, 1), 0.1, dtype=jnp.float32)
    out2 = jax.block_until_ready(graph_channel_layer(adj2, w2))
    assert out2.shape == (N2, N2)
    assert jnp.allclose(out2, _reference(adj2, w2), atol=1e-5, rtol=1e-5), "mismatch vs reference (ragged N=160)"

    print("KERNEL_OK")
</pallas_src>

<mosaic_0001>
module attributes {stable_mosaic.version = 11 : i64} {
  func.func @_graph_channel_kernel(%arg0: i32, %arg1: i32, %arg2: memref<4xf32, #tpu.memory_space<smem>>, %arg3: memref<1x256x128xf32, #tpu.memory_space<vmem>>, %arg4: memref<256x128xf32, #tpu.memory_space<vmem>>) attributes {dimension_semantics = [#tpu.dimension_semantics<parallel>, #tpu.dimension_semantics<arbitrary>], iteration_bounds = array<i64: 2, 4>, scalar_prefetch = 0 : i64, scratch_operands = 0 : i64, tpu.core_type = #tpu.core_type<tc>, window_params = [{transform_indices = @transform_0, window_bounds = array<i64: 4>}, {transform_indices = @transform_1, window_bounds = array<i64: 1, 256, 128>}, {transform_indices = @transform_2, window_bounds = array<i64: 256, 128>}]} {
    %c0 = arith.constant 0 : index
    %c0_0 = arith.constant 0 : index
    %c0_1 = arith.constant 0 : index
    %0 = vector.load %arg3[%c0, %c0_0, %c0_1] : memref<1x256x128xf32, #tpu.memory_space<vmem>>, vector<1x256x128xf32>
    %1 = vector.shape_cast %0 : vector<1x256x128xf32> to vector<256x128xf32>
    %2 = arith.mulf %1, %1 : vector<256x128xf32>
    %cst = arith.constant dense<0.000000e+00> : vector<128xf32>
    %3 = vector.multi_reduction <add>, %2, %cst [0] : vector<256x128xf32> to vector<128xf32>
    %4 = vector.shape_cast %3 : vector<128xf32> to vector<1x128xf32>
    %cst_2 = arith.constant 1.000000e-24 : f32
    %5 = vector.broadcast %cst_2 : f32 to vector<1x128xf32>
    %6 = arith.maximumf %4, %5 : vector<1x128xf32>
    %7 = math.rsqrt %6 : vector<1x128xf32>
    %8 = arith.index_cast %arg1 : i32 to index
    %9 = memref.load %arg2[%8] : memref<4xf32, #tpu.memory_space<smem>>
    %10 = vector.broadcast %9 : f32 to vector<1x128xf32>
    %11 = arith.mulf %7, %10 : vector<1x128xf32>
    %c0_3 = arith.constant 0 : index
    %c0_4 = arith.constant 0 : index
    %c0_5 = arith.constant 0 : index
    %12 = vector.load %arg3[%c0_3, %c0_4, %c0_5] : memref<1x256x128xf32, #tpu.memory_space<vmem>>, vector<1x256x128xf32>
    %13 = vector.shape_cast %12 : vector<1x256x128xf32> to vector<256x128xf32>
    %14 = vector.broadcast %11 : vector<1x128xf32> to vector<256x128xf32>
    %15 = arith.mulf %13, %14 : vector<256x128xf32>
    %c0_i32 = arith.constant 0 : i32
    %16 = arith.cmpi eq, %arg1, %c0_i32 : i32
    %17 = arith.extui %16 : i1 to i32
    %c0_i32_6 = arith.constant 0 : i32
    %18 = arith.cmpi ne, %17, %c0_i32_6 : i32
    scf.if %18 {
      %c0_9 = arith.constant 0 : index
      %c0_10 = arith.constant 0 : index
      %22 = vector.load %arg4[%c0_9, %c0_10] : memref<256x128xf32, #tpu.memory_space<vmem>>, vector<256x128xf32>
      tpu.vector_store %arg4[%c0_9, %c0_10], %15 {strides = array<i32>} : memref<256x128xf32, #tpu.memory_space<vmem>>, vector<256x128xf32>,
    } else {
    }
    %c0_i32_7 = arith.constant 0 : i32
    %19 = arith.cmpi sgt, %arg1, %c0_i32_7 : i32
    %20 = arith.extui %19 : i1 to i32
    %c0_i32_8 = arith.constant 0 : i32
    %21 = arith.cmpi ne, %20, %c0_i32_8 : i32
    scf.if %21 {
      %c0_9 = arith.constant 0 : index
      %c0_10 = arith.constant 0 : index
      %22 = vector.load %arg4[%c0_9, %c0_10] : memref<256x128xf32, #tpu.memory_space<vmem>>, vector<256x128xf32>
      %23 = arith.addf %22, %15 : vector<256x128xf32>
      %c0_11 = arith.constant 0 : index
      %c0_12 = arith.constant 0 : index
      %24 = vector.load %arg4[%c0_11, %c0_12] : memref<256x128xf32, #tpu.memory_space<vmem>>, vector<256x128xf32>
      tpu.vector_store %arg4[%c0_11, %c0_12], %23 {strides = array<i32>} : memref<256x128xf32, #tpu.memory_space<vmem>>, vector<256x128xf32>,
    } else {
    }
    return
  }
  func.func @transform_0(%arg0: i32, %arg1: i32) -> i32 {
    %c0_i32 = arith.constant 0 : i32
    %c0_i32_0 = arith.constant 0 : i32
    return %c0_i32 : i32
  }
  func.func @transform_1(%arg0: i32, %arg1: i32) -> (i32, i32, i32) {
    %c0_i32 = arith.constant 0 : i32
    %c0_i32_0 = arith.constant 0 : i32
    return %arg1, %c0_i32, %arg0 : i32, i32, i32
  }
  func.func @transform_2(%arg0: i32, %arg1: i32) -> (i32, i32) {
    %c0_i32 = arith.constant 0 : i32
    %c0_i32_0 = arith.constant 0 : i32
    return %c0_i32, %arg0 : i32, i32
  }
}

</mosaic_0001>

<llo_original>
// kernel: tpu_custom_call.1
$region0: #{tpu_custom_call.1}
  #allocation0 [shape = 'u32[]', space=smem, size = 0x4, offset = 0x4, fixed_abs, tag = 'smem constant byte address 0x4 - core index']
  #allocation1 [shape = 'u32[144,128]{1,0:T(1,128)}', space=vmem, size = 0x12000, scoped, tag = 'internal scratch']
  %s0 = inlined_call_operand.hbm [shape: f32[4], index: 0, kind: input, shape index: {}]
  %s1 = inlined_call_operand.hbm [shape: f32[4,256,256], index: 1, kind: input, shape index: {}]
  %s2 = inlined_call_operand.hbm [shape: f32[256,256], index: 2, kind: output, shape index: {}]
  %s3 = sld [smem:[#allocation0]]
  $region57: #{tpu_custom_call.1} parent=0
    _
  %s5 = ssub.s32 1, %s3
  %s6 = scalar_select 0, %s5, %s3
  $region1: #{tpu_custom_call.1} parent=0
    #allocation2 [shape = 'u8[512]{0}', space=smem, size = 0x200, scoped, tag = 'input window, operand 0, single buffered']
    #allocation3 [shape = 's32[2]{0}', space=sflag, size = 0x8, scoped, tag = 'scoped memory for tpu_custom_call.1']
    #allocation4 [shape = 's32[2]{0}', space=sflag, size = 0x8, scoped, tag = 'scoped memory for tpu_custom_call.1']
    #allocation5 [shape = 's32[2]{0}', space=sflag, size = 0x8, scoped, tag = 'scoped memory for tpu_custom_call.1']
    #allocation6 [shape = 'u8[262144]{0}', space=vmem, size = 0x40000, scoped, tag = 'input window, operand 1']
    #allocation7 [shape = 'u8[262144]{0}', space=vmem, size = 0x40000, scoped, tag = 'output window, operand 0']
    %7 = vsyncpa [#allocation5], 0
    %8 = vsyncpa [#allocation3], 0
    %s9 = scalar_lea.sflag [#allocation3], 1
    %10 = vsyncpa %s9, 0
    %11 = vsyncpa [#allocation4], 0
    %s12 = scalar_lea.sflag [#allocation4], 1
    %13 = vsyncpa %s12, 0
    loop: start=0, step=1, limit=10
    $region2: #{tpu_custom_call.1} parent=1 // loop_pre_header
      _
    $region3: #{tpu_custom_call.1} parent=1 // loop_header
      %s15 = sphi 0, %s19
      %p16 = scmp.ge.s32.totalorder %s15, 10
      %s22 = sphi 0, %s34
      %s23 = sphi 0, %s30
      %s24 = sphi 0, %s22
      %s25 = sphi 0, %s23
      %s26 = sphi 0, %s24
      %s27 = sphi 0, %s25
      %s35 = sphi 0, %s35
      %s37 = sphi 0, %s35
      %s38 = sphi 0, %s37
      %s52 = sphi 0, %s38
      %s60 = sphi 0, %s62
      %s63 = sphi 0, %s60
      %s64 = sphi 0, %s63
      %s80 = sphi 0, %s64
      %s86 = sphi 0, %s88
      %s89 = sphi 0, %s86
      %s90 = sphi 0, %s89
      %s106 = sphi 0, %s90
    $region4: #{tpu_custom_call.1} parent=1 // loop_header_branch
      %18 = sbr.rel (%p16) target = $region8
    $region5: #{tpu_custom_call.1} parent=1 // loop_body
      %s20 = ssub.s32 %s15, 1
      %s21 = ssub.s32 %s15, 2
      %s28 = sadd.s32 1, %s23
      %p29 = scmp.ge.s32.totalorder %s28, 4
      %s30 = scalar_select %p29, 0, %s28
      %s31 = sadd.s32 1, %s22
      %s32 = scalar_select %p29, %s31, %s22
      %p33 = scmp.ge.s32.totalorder %s32, 2
      %s34 = scalar_select %p33, 0, %s32
      %s36 = sadd.s32 %s35, 1
      %p39 = scmp.eq.s32.totalorder %s15, 7
      %p40 = scmp.ne.s32.totalorder %s35, %s37
      %p41 = scmp.eq.s32.totalorder %s15, 0
      %p42 = por %p40, %p41
      %p43 = scmp.ne.s32.totalorder %s35, %s37
      %p44 = scmp.eq.s32.totalorder %s20, 7
      %p45 = por %p43, %p44
      %p46 = scmp.ne.s32.totalorder %s37, %s38
      %p47 = scmp.eq.s32.totalorder %s20, 0
      %p48 = por %p46, %p47
      %p49 = scmp.ne.s32.totalorder %s37, %s38
      %p50 = scmp.eq.s32.totalorder %s21, 7
      %p51 = por %p49, %p50
      %p53 = scmp.ne.s32.totalorder %s38, %s52
      %p54 = scmp.eq.s32.totalorder %s21, 0
      %p55 = por %p53, %p54
      %s56 = ssub.s32 %s23, %s30
      %s57 = ssub.s32 %s22, %s34
      %s58 = sor.u32 %s56, %s57
      %p59 = scmp.eq.s32.totalorder %s58, 0
      %s61 = sadd.s32 %s60, 1
      %s62 = scalar_select %p59, %s60, %s61
      %p65 = pneg %p59
      %p66 = scmp.eq.s32.totalorder %s15, 7
      %p67 = por %p65, %p66
      %p68 = scmp.ne.s32.totalorder %s60, %s63
      %p69 = scmp.eq.s32.totalorder %s15, 0
      %p70 = por %p68, %p69
      %p71 = scmp.ne.s32.totalorder %s60, %s63
      %p72 = scmp.eq.s32.totalorder %s20, 7
      %p73 = por %p71, %p72
      %p74 = scmp.ne.s32.totalorder %s63, %s64
      %p75 = scmp.eq.s32.totalorder %s20, 0
      %p76 = por %p74, %p75
      %p77 = scmp.ne.s32.totalorder %s63, %s64
      %p78 = scmp.eq.s32.totalorder %s21, 7
      %p79 = por %p77, %p78
      %p81 = scmp.ne.s32.totalorder %s64, %s80
      %p82 = scmp.eq.s32.totalorder %s21, 0
      %p83 = por %p81, %p82
      %s84 = ssub.s32 %s22, %s34
      %p85 = scmp.eq.s32.totalorder %s84, 0
      %s87 = sadd.s32 %s86, 1
      %s88 = scalar_select %p85, %s86, %s87
      %p91 = pneg %p85
      %p92 = scmp.eq.s32.totalorder %s15, 7
      %p93 = por %p91, %p92
      %p94 = scmp.ne.s32.totalorder %s86, %s89
      %p95 = scmp.eq.s32.totalorder %s15, 0
      %p96 = por %p94, %p95
      %p97 = scmp.ne.s32.totalorder %s86, %s89
      %p98 = scmp.eq.s32.totalorder %s20, 7
      %p99 = por %p97, %p98
      %p100 = scmp.ne.s32.totalorder %s89, %s90
      %p101 = scmp.eq.s32.totalorder %s20, 0
      %p102 = por %p100, %p101
      %p103 = scmp.ne.s32.totalorder %s89, %s90
      %p104 = scmp.eq.s32.totalorder %s21, 7
      %p105 = por %p103, %p104
      %p107 = scmp.ne.s32.totalorder %s90, %s106
      %p108 = scmp.eq.s32.totalorder %s21, 0
      %p109 = por %p107, %p108
      %p110 = scmp.le.s32.totalorder 1, %s15
      %p111 = scmp.lt.s32.totalorder %s15, 9
      %p112 = pnand %p110, %p111
      %p113 = pneg %p112
      // Predicated region
      $region9: #{tpu_custom_call.1} parent=5 // pred_check
        _
      $region10: #{tpu_custom_call.1} parent=5 // pred_check_branch
        %115 = sbr.rel (%p112) target = $region12
      $region11: #{tpu_custom_call.1} parent=5 // pred_region
        %s116 = ssub.s32 %s15, 1
        // Predicated region
        $region13: #{tpu_custom_call.1} parent=11 // pred_check
          %p117 = pneg %p48
        $region14: #{tpu_custom_call.1} parent=11 // pred_check_branch
          %119 = sbr.rel (%p117) target = $region16
        $region15: #{tpu_custom_call.1} parent=11 // pred_region
          %s121 = ssub.s32 16, 16
          %122 = vsyncadd [#allocation5], %s121
          %125 = dma.hbm_to_smem %s0, 16, [#allocation2], [#allocation5]
        $region16: #{tpu_custom_call.1} parent=11 // pred_fallthru
          _
      $region12: #{tpu_custom_call.1} parent=5 // pred_fallthru
        _
      %p126 = scmp.lt.s32.totalorder %s15, 8
      // Predicated region
      $region17: #{tpu_custom_call.1} parent=5 // pred_check
        %p127 = pneg %p126
      $region18: #{tpu_custom_call.1} parent=5 // pred_check_branch
        %129 = sbr.rel (%p127) target = $region20
      $region19: #{tpu_custom_call.1} parent=5 // pred_region
        // Predicated region
        $region21: #{tpu_custom_call.1} parent=19 // pred_check
          %p130 = pneg %p70
        $region22: #{tpu_custom_call.1} parent=19 // pred_check_branch
          %132 = sbr.rel (%p130) target = $region24
        $region23: #{tpu_custom_call.1} parent=19 // pred_region
          %s133 = sand.u32 %s60, 1
          %s134 = scalar_lea.sflag [#allocation3], %s133
          %s135 = sand.u32 %s60, 1
          %s136 = smul.addr %s135, 256
          %s137 = scalar_lea.vmem [#allocation6], %s136
          %s139 = ssub.s32 4096, 4096
          %140 = vsyncadd %s134, %s139
          %s141 = smul.addr %s23, 64
          %s142 = sadd.s32 %s22, %s141
          %s143 = smul.addr %s142, 128
          %s144 = scalar_lea.hbm %s1, %s143
          %s145 = sshll.u32 %s137, 4
          %s146 = int_to_ptr.vmem [resolvable:$true] %s145
          %151 = dma.hbm_to_vmem [thread:$0]  %s144, 4096, %s146, %s134, 256, 128, 8
        $region24: #{tpu_custom_call.1} parent=19 // pred_fallthru
          _
      $region20: #{tpu_custom_call.1} parent=5 // pred_fallthru
        _
      %p152 = scmp.le.s32.totalorder 1, %s15
      %p153 = scmp.lt.s32.totalorder %s15, 9
      %p154 = pnand %p152, %p153
      %p155 = pneg %p154
      // Predicated region
      $region25: #{tpu_custom_call.1} parent=5 // pred_check
        _
      $region26: #{tpu_custom_call.1} parent=5 // pred_check_branch
        %157 = sbr.rel (%p154) target = $region28
      $region27: #{tpu_custom_call.1} parent=5 // pred_region
        %s158 = ssub.s32 %s15, 1
        // Predicated region
        $region29: #{tpu_custom_call.1} parent=27 // pred_check
          %p159 = pneg %p48
        $region30: #{tpu_custom_call.1} parent=27 // pred_check_branch
          %161 = sbr.rel (%p159) target = $region32
        $region31: #{tpu_custom_call.1} parent=27 // pred_region
          %162 = dma.done [#allocation5], 16
        $region32: #{tpu_custom_call.1} parent=27 // pred_fallthru
          _
        %s163 = sand.u32 %s63, 1
        %s164 = scalar_lea.sflag [#allocation3], %s163
        %s165 = sand.u32 %s63, 1
        %s166 = smul.addr %s165, 256
        %s167 = scalar_lea.vmem [#allocation6], %s166
        // Predicated region
        $region33: #{tpu_custom_call.1} parent=27 // pred_check
          %p168 = pneg %p76
        $region34: #{tpu_custom_call.1} parent=27 // pred_check_branch
          %170 = sbr.rel (%p168) target = $region36
        $region35: #{tpu_custom_call.1} parent=27 // pred_region
          %171 = dma.done %s164, 4096
        $region36: #{tpu_custom_call.1} parent=27 // pred_fallthru
          _
        %172 = sfence
        %p173 = pneg %p48
        %p174 = pneg %p45
        %s175 = sand.u32 %s63, 1
        %s176 = scalar_lea.sflag [#allocation3], %s175
        %s177 = sand.u32 %s63, 1
        %s178 = smul.addr %s177, 256
        %s179 = scalar_lea.vmem [#allocation6], %s178
        %p180 = pneg %p76
        %p181 = pneg %p73
        %p182 = pneg %p102
        %p183 = pneg %p99
        %s184 = sand.u32 %s89, 1
        %s185 = scalar_lea.sflag [#allocation4], %s184
        %s186 = sand.u32 %s89, 1
        %s187 = smul.addr %s186, 256
        %s188 = scalar_lea.vmem [#allocation7], %s187
        %v189 = vld [vmem:[%s167] sm:$0xff]
        %v190 = vld [vmem:[%s167 + $0x8] sm:$0xff]
        %v191 = vld [vmem:[%s167 + $0x10] sm:$0xff]
        %v192 = vld [vmem:[%s167 + $0x18] sm:$0xff]
        %v193 = vld [vmem:[%s167 + $0x20] sm:$0xff]
        %v194 = vld [vmem:[%s167 + $0x28] sm:$0xff]
        %v195 = vld [vmem:[%s167 + $0x30] sm:$0xff]
        %v196 = vld [vmem:[%s167 + $0x38] sm:$0xff]
        %v197 = vld [vmem:[%s167 + $0x40] sm:$0xff]
        %v198 = vld [vmem:[%s167 + $0x48] sm:$0xff]
        %v199 = vld [vmem:[%s167 + $0x50] sm:$0xff]
        %v200 = vld [vmem:[%s167 + $0x58] sm:$0xff]
        %v201 = vld [vmem:[%s167 + $0x60] sm:$0xff]
        %v202 = vld [vmem:[%s167 + $0x68] sm:$0xff]
        %v203 = vld [vmem:[%s167 + $0x70] sm:$0xff]
        %v204 = vld [vmem:[%s167 + $0x78] sm:$0xff]
        %v205 = vld [vmem:[%s167 + $0x80] sm:$0xff]
        %v206 = vld [vmem:[%s167 + $0x88] sm:$0xff]
        %v207 = vld [vmem:[%s167 + $0x90] sm:$0xff]
        %v208 = vld [vmem:[%s167 + $0x98] sm:$0xff]
        %v209 = vld [vmem:[%s167 + $0xa0] sm:$0xff]
        %v210 = vld [vmem:[%s167 + $0xa8] sm:$0xff]
        %v211 = vld [vmem:[%s167 + $0xb0] sm:$0xff]
        %v212 = vld [vmem:[%s167 + $0xb8] sm:$0xff]
        %v213 = vld [vmem:[%s167 + $0xc0] sm:$0xff]
        %v214 = vld [vmem:[%s167 + $0xc8] sm:$0xff]
        %v215 = vld [vmem:[%s167 + $0xd0] sm:$0xff]
        %v216 = vld [vmem:[%s167 + $0xd8] sm:$0xff]
        %v217 = vld [vmem:[%s167 + $0xe0] sm:$0xff]
        %v218 = vld [vmem:[%s167 + $0xe8] sm:$0xff]
        %v219 = vld [vmem:[%s167 + $0xf0] sm:$0xff]
        %v220 = vld [vmem:[%s167 + $0xf8] sm:$0xff]
        %v221 = vmul.f32 %v189, %v189
        %v222 = vmul.f32 %v190, %v190
        %v223 = vmul.f32 %v191, %v191
        %v224 = vmul.f32 %v192, %v192
        %v225 = vmul.f32 %v193, %v193
        %v226 = vmul.f32 %v194, %v194
        %v227 = vmul.f32 %v195, %v195
        %v228 = vmul.f32 %v196, %v196
        %v229 = vmul.f32 %v197, %v197
        %v230 = vmul.f32 %v198, %v198
        %v231 = vmul.f32 %v199, %v199
        %v232 = vmul.f32 %v200, %v200
        %v233 = vmul.f32 %v201, %v201
        %v234 = vmul.f32 %v202, %v202
        %v235 = vmul.f32 %v203, %v203
        %v236 = vmul.f32 %v204, %v204
        %v237 = vmul.f32 %v205, %v205
        %v238 = vmul.f32 %v206, %v206
        %v239 = vmul.f32 %v207, %v207
        %v240 = vmul.f32 %v208, %v208
        %v241 = vmul.f32 %v209, %v209
        %v242 = vmul.f32 %v210, %v210
        %v243 = vmul.f32 %v211, %v211
        %v244 = vmul.f32 %v212, %v212
        %v245 = vmul.f32 %v213, %v213
        %v246 = vmul.f32 %v214, %v214
        %v247 = vmul.f32 %v215, %v215
        %v248 = vmul.f32 %v216, %v216
        %v249 = vmul.f32 %v217, %v217
        %v250 = vmul.f32 %v218, %v218
        %v251 = vmul.f32 %v219, %v219
        %v252 = vmul.f32 %v220, %v220
        %v253 = vadd.f32 %v221, %v222
        %v254 = vadd.f32 %v253, %v223
        %v255 = vadd.f32 %v254, %v224
        %v256 = vadd.f32 %v255, %v225
        %v257 = vadd.f32 %v256, %v226
        %v258 = vadd.f32 %v257, %v227
        %v259 = vadd.f32 %v258, %v228
        %v260 = vadd.f32 %v259, %v229
        %v261 = vadd.f32 %v260, %v230
        %v262 = vadd.f32 %v261, %v231
        %v263 = vadd.f32 %v262, %v232
        %v264 = vadd.f32 %v263, %v233
        %v265 = vadd.f32 %v264, %v234
        %v266 = vadd.f32 %v265, %v235
        %v267 = vadd.f32 %v266, %v236
        %v268 = vadd.f32 %v267, %v237
        %v269 = vadd.f32 %v268, %v238
        %v270 = vadd.f32 %v269, %v239
        %v271 = vadd.f32 %v270, %v240
        %v272 = vadd.f32 %v271, %v241
        %v273 = vadd.f32 %v272, %v242
        %v274 = vadd.f32 %v273, %v243
        %v275 = vadd.f32 %v274, %v244
        %v276 = vadd.f32 %v275, %v245
        %v277 = vadd.f32 %v276, %v246
        %v278 = vadd.f32 %v277, %v247
        %v279 = vadd.f32 %v278, %v248
        %v280 = vadd.f32 %v279, %v249
        %v281 = vadd.f32 %v280, %v250
        %v282 = vadd.f32 %v281, %v251
        %v283 = vadd.f32 %v282, %v252
        %v284 = vrot.slane %v283, 4
        %v285 = vadd.f32 %v283, %v284
        %v286 = vrot.slane %v285, 2
        %v287 = vadd.f32 %v285, %v286
        %v288 = vrot.slane %v287, 1
        %v289 = vadd.f32 %v287, %v288
        %v290 = vmax.f32 %v289, 1e-24
        %v291 = vrsqrt.pop %v290
        %s292 = sld [smem:[#allocation2 + %s25]]
        %v293 = vstv %s292
        %v294 = vmul.f32 %v291, %v293
        %v295 = vmul.f32 %v189, %v294
        %v296 = vmul.f32 %v190, %v294
        %v297 = vmul.f32 %v191, %v294
        %v298 = vmul.f32 %v192, %v294
        %v299 = vmul.f32 %v193, %v294
        %v300 = vmul.f32 %v194, %v294
        %v301 = vmul.f32 %v195, %v294
        %v302 = vmul.f32 %v196, %v294
        %v303 = vmul.f32 %v197, %v294
        %v304 = vmul.f32 %v198, %v294
        %v305 = vmul.f32 %v199, %v294
        %v306 = vmul.f32 %v200, %v294
        %v307 = vmul.f32 %v201, %v294
        %v308 = vmul.f32 %v202, %v294
        %v309 = vmul.f32 %v203, %v294
        %v310 = vmul.f32 %v204, %v294
        %v311 = vmul.f32 %v205, %v294
        %v312 = vmul.f32 %v206, %v294
        %v313 = vmul.f32 %v207, %v294
        %v314 = vmul.f32 %v208, %v294
        %v315 = vmul.f32 %v209, %v294
        %v316 = vmul.f32 %v210, %v294
        %v317 = vmul.f32 %v211, %v294
        %v318 = vmul.f32 %v212, %v294
        %v319 = vmul.f32 %v213, %v294
        %v320 = vmul.f32 %v214, %v294
        %v321 = vmul.f32 %v215, %v294
        %v322 = vmul.f32 %v216, %v294
        %v323 = vmul.f32 %v217, %v294
        %v324 = vmul.f32 %v218, %v294
        %v325 = vmul.f32 %v219, %v294
        %v326 = vmul.f32 %v220, %v294
        %p327 = scmp.eq.s32.totalorder %s25, 0
        // Predicated region
        $region37: #{tpu_custom_call.1} parent=27 // pred_check
          %p328 = pneg %p327
        $region38: #{tpu_custom_call.1} parent=27 // pred_check_branch
          %330 = sbr.rel (%p328) target = $region40
        $region39: #{tpu_custom_call.1} parent=27 // pred_region
          %331 = vst [vmem:[%s188] sm:$0xff] %v295
          %332 = vst [vmem:[%s188 + $0x8] sm:$0xff] %v296
          %333 = vst [vmem:[%s188 + $0x10] sm:$0xff] %v297
          %334 = vst [vmem:[%s188 + $0x18] sm:$0xff] %v298
          %335 = vst [vmem:[%s188 + $0x20] sm:$0xff] %v299
          %336 = vst [vmem:[%s188 + $0x28] sm:$0xff] %v300
          %337 = vst [vmem:[%s188 + $0x30] sm:$0xff] %v301
          %338 = vst [vmem:[%s188 + $0x38] sm:$0xff] %v302
          %339 = vst [vmem:[%s188 + $0x40] sm:$0xff] %v303
          %340 = vst [vmem:[%s188 + $0x48] sm:$0xff] %v304
          %341 = vst [vmem:[%s188 + $0x50] sm:$0xff] %v305
          %342 = vst [vmem:[%s188 + $0x58] sm:$0xff] %v306
          %343 = vst [vmem:[%s188 + $0x60] sm:$0xff] %v307
          %344 = vst [vmem:[%s188 + $0x68] sm:$0xff] %v308
          %345 = vst [vmem:[%s188 + $0x70] sm:$0xff] %v309
          %346 = vst [vmem:[%s188 + $0x78] sm:$0xff] %v310
          %347 = vst [vmem:[%s188 + $0x80] sm:$0xff] %v311
          %348 = vst [vmem:[%s188 + $0x88] sm:$0xff] %v312
          %349 = vst [vmem:[%s188 + $0x90] sm:$0xff] %v313
          %350 = vst [vmem:[%s188 + $0x98] sm:$0xff] %v314
          %351 = vst [vmem:[%s188 + $0xa0] sm:$0xff] %v315
          %352 = vst [vmem:[%s188 + $0xa8] sm:$0xff] %v316
          %353 = vst [vmem:[%s188 + $0xb0] sm:$0xff] %v317
          %354 = vst [vmem:[%s188 + $0xb8] sm:$0xff] %v318
          %355 = vst [vmem:[%s188 + $0xc0] sm:$0xff] %v319
          %356 = vst [vmem:[%s188 + $0xc8] sm:$0xff] %v320
          %357 = vst [vmem:[%s188 + $0xd0] sm:$0xff] %v321
          %358 = vst [vmem:[%s188 + $0xd8] sm:$0xff] %v322
          %359 = vst [vmem:[%s188 + $0xe0] sm:$0xff] %v323
          %360 = vst [vmem:[%s188 + $0xe8] sm:$0xff] %v324
          %361 = vst [vmem:[%s188 + $0xf0] sm:$0xff] %v325
          %362 = vst [vmem:[%s188 + $0xf8] sm:$0xff] %v326
        $region40: #{tpu_custom_call.1} parent=27 // pred_fallthru
          _
        %p363 = scmp.gt.s32.totalorder %s25, 0
        // Predicated region
        $region41: #{tpu_custom_call.1} parent=27 // pred_check
          %p364 = pneg %p363
        $region42: #{tpu_custom_call.1} parent=27 // pred_check_branch
          %366 = sbr.rel (%p364) target = $region44
        $region43: #{tpu_custom_call.1} parent=27 // pred_region
          %v367 = vld [vmem:[%s188] sm:$0xff]
          %v368 = vld [vmem:[%s188 + $0x8] sm:$0xff]
          %v369 = vld [vmem:[%s188 + $0x10] sm:$0xff]
          %v370 = vld [vmem:[%s188 + $0x18] sm:$0xff]
          %v371 = vld [vmem:[%s188 + $0x20] sm:$0xff]
          %v372 = vld [vmem:[%s188 + $0x28] sm:$0xff]
          %v373 = vld [vmem:[%s188 + $0x30] sm:$0xff]
          %v374 = vld [vmem:[%s188 + $0x38] sm:$0xff]
          %v375 = vld [vmem:[%s188 + $0x40] sm:$0xff]
          %v376 = vld [vmem:[%s188 + $0x48] sm:$0xff]
          %v377 = vld [vmem:[%s188 + $0x50] sm:$0xff]
          %v378 = vld [vmem:[%s188 + $0x58] sm:$0xff]
          %v379 = vld [vmem:[%s188 + $0x60] sm:$0xff]
          %v380 = vld [vmem:[%s188 + $0x68] sm:$0xff]
          %v381 = vld [vmem:[%s188 + $0x70] sm:$0xff]
          %v382 = vld [vmem:[%s188 + $0x78] sm:$0xff]
          %v383 = vld [vmem:[%s188 + $0x80] sm:$0xff]
          %v384 = vld [vmem:[%s188 + $0x88] sm:$0xff]
          %v385 = vld [vmem:[%s188 + $0x90] sm:$0xff]
          %v386 = vld [vmem:[%s188 + $0x98] sm:$0xff]
          %v387 = vld [vmem:[%s188 + $0xa0] sm:$0xff]
          %v388 = vld [vmem:[%s188 + $0xa8] sm:$0xff]
          %v389 = vld [vmem:[%s188 + $0xb0] sm:$0xff]
          %v390 = vld [vmem:[%s188 + $0xb8] sm:$0xff]
          %v391 = vld [vmem:[%s188 + $0xc0] sm:$0xff]
          %v392 = vld [vmem:[%s188 + $0xc8] sm:$0xff]
          %v393 = vld [vmem:[%s188 + $0xd0] sm:$0xff]
          %v394 = vld [vmem:[%s188 + $0xd8] sm:$0xff]
          %v395 = vld [vmem:[%s188 + $0xe0] sm:$0xff]
          %v396 = vld [vmem:[%s188 + $0xe8] sm:$0xff]
          %v397 = vld [vmem:[%s188 + $0xf0] sm:$0xff]
          %v398 = vld [vmem:[%s188 + $0xf8] sm:$0xff]
          %v399 = vadd.f32 %v367, %v295
          %v400 = vadd.f32 %v368, %v296
          %v401 = vadd.f32 %v369, %v297
          %v402 = vadd.f32 %v370, %v298
          %v403 = vadd.f32 %v371, %v299
          %v404 = vadd.f32 %v372, %v300
          %v405 = vadd.f32 %v373, %v301
          %v406 = vadd.f32 %v374, %v302
          %v407 = vadd.f32 %v375, %v303
          %v408 = vadd.f32 %v376, %v304
          %v409 = vadd.f32 %v377, %v305
          %v410 = vadd.f32 %v378, %v306
          %v411 = vadd.f32 %v379, %v307
          %v412 = vadd.f32 %v380, %v308
          %v413 = vadd.f32 %v381, %v309
          %v414 = vadd.f32 %v382, %v310
          %v415 = vadd.f32 %v383, %v311
          %v416 = vadd.f32 %v384, %v312
          %v417 = vadd.f32 %v385, %v313
          %v418 = vadd.f32 %v386, %v314
          %v419 = vadd.f32 %v387, %v315
          %v420 = vadd.f32 %v388, %v316
          %v421 = vadd.f32 %v389, %v317
          %v422 = vadd.f32 %v390, %v318
          %v423 = vadd.f32 %v391, %v319
          %v424 = vadd.f32 %v392, %v320
          %v425 = vadd.f32 %v393, %v321
          %v426 = vadd.f32 %v394, %v322
          %v427 = vadd.f32 %v395, %v323
          %v428 = vadd.f32 %v396, %v324
          %v429 = vadd.f32 %v397, %v325
          %v430 = vadd.f32 %v398, %v326
          %431 = vst [vmem:[%s188] sm:$0xff] %v399
          %432 = vst [vmem:[%s188 + $0x8] sm:$0xff] %v400
          %433 = vst [vmem:[%s188 + $0x10] sm:$0xff] %v401
          %434 = vst [vmem:[%s188 + $0x18] sm:$0xff] %v402
          %435 = vst [vmem:[%s188 + $0x20] sm:$0xff] %v403
          %436 = vst [vmem:[%s188 + $0x28] sm:$0xff] %v404
          %437 = vst [vmem:[%s188 + $0x30] sm:$0xff] %v405
          %438 = vst [vmem:[%s188 + $0x38] sm:$0xff] %v406
          %439 = vst [vmem:[%s188 + $0x40] sm:$0xff] %v407
          %440 = vst [vmem:[%s188 + $0x48] sm:$0xff] %v408
          %441 = vst [vmem:[%s188 + $0x50] sm:$0xff] %v409
          %442 = vst [vmem:[%s188 + $0x58] sm:$0xff] %v410
          %443 = vst [vmem:[%s188 + $0x60] sm:$0xff] %v411
          %444 = vst [vmem:[%s188 + $0x68] sm:$0xff] %v412
          %445 = vst [vmem:[%s188 + $0x70] sm:$0xff] %v413
          %446 = vst [vmem:[%s188 + $0x78] sm:$0xff] %v414
          %447 = vst [vmem:[%s188 + $0x80] sm:$0xff] %v415
          %448 = vst [vmem:[%s188 + $0x88] sm:$0xff] %v416
          %449 = vst [vmem:[%s188 + $0x90] sm:$0xff] %v417
          %450 = vst [vmem:[%s188 + $0x98] sm:$0xff] %v418
          %451 = vst [vmem:[%s188 + $0xa0] sm:$0xff] %v419
          %452 = vst [vmem:[%s188 + $0xa8] sm:$0xff] %v420
          %453 = vst [vmem:[%s188 + $0xb0] sm:$0xff] %v421
          %454 = vst [vmem:[%s188 + $0xb8] sm:$0xff] %v422
          %455 = vst [vmem:[%s188 + $0xc0] sm:$0xff] %v423
          %456 = vst [vmem:[%s188 + $0xc8] sm:$0xff] %v424
          %457 = vst [vmem:[%s188 + $0xd0] sm:$0xff] %v425
          %458 = vst [vmem:[%s188 + $0xd8] sm:$0xff] %v426
          %459 = vst [vmem:[%s188 + $0xe0] sm:$0xff] %v427
          %460 = vst [vmem:[%s188 + $0xe8] sm:$0xff] %v428
          %461 = vst [vmem:[%s188 + $0xf0] sm:$0xff] %v429
          %462 = vst [vmem:[%s188 + $0xf8] sm:$0xff] %v430
        $region44: #{tpu_custom_call.1} parent=27 // pred_fallthru
          _
        %s463 = sand.u32 %s89, 1
        %s464 = scalar_lea.sflag [#allocation4], %s463
        %s465 = sand.u32 %s89, 1
        %s466 = smul.addr %s465, 256
        %s467 = scalar_lea.vmem [#allocation7], %s466
        // Predicated region
        $region45: #{tpu_custom_call.1} parent=27 // pred_check
          %p468 = pneg %p99
        $region46: #{tpu_custom_call.1} parent=27 // pred_check_branch
          %470 = sbr.rel (%p468) target = $region48
        $region47: #{tpu_custom_call.1} parent=27 // pred_region
          %s472 = ssub.s32 4096, 4096
          %473 = vsyncadd %s464, %s472
          %s474 = smul.addr %s24, 128
          %s475 = scalar_lea.hbm %s2, %s474
          %s476 = sshll.u32 %s467, 4
          %s477 = int_to_ptr.vmem [resolvable:$true] %s476
          %482 = dma.vmem_to_hbm [thread:$0]  %s477, 4096, %s475, %s464, 128, 256, 8
        $region48: #{tpu_custom_call.1} parent=27 // pred_fallthru
          _
      $region28: #{tpu_custom_call.1} parent=5 // pred_fallthru
        _
      %p483 = scmp.le.s32.totalorder 2, %s15
      // Predicated region
      $region49: #{tpu_custom_call.1} parent=5 // pred_check
        %p484 = pneg %p483
      $region50: #{tpu_custom_call.1} parent=5 // pred_check_branch
        %486 = sbr.rel (%p484) target = $region52
      $region51: #{tpu_custom_call.1} parent=5 // pred_region
        %s487 = ssub.s32 %s15, 2
        // Predicated region
        $region53: #{tpu_custom_call.1} parent=51 // pred_check
          %p488 = pneg %p105
        $region54: #{tpu_custom_call.1} parent=51 // pred_check_branch
          %490 = sbr.rel (%p488) target = $region56
        $region55: #{tpu_custom_call.1} parent=51 // pred_region
          %s491 = sand.u32 %s90, 1
          %s492 = scalar_lea.sflag [#allocation4], %s491
          %s493 = sand.u32 %s90, 1
          %s494 = smul.addr %s493, 256
          %s495 = scalar_lea.vmem [#allocation7], %s494
          %496 = dma.done %s492, 4096
        $region56: #{tpu_custom_call.1} parent=51 // pred_fallthru
          _
      $region52: #{tpu_custom_call.1} parent=5 // pred_fallthru
        _
    $region6: #{tpu_custom_call.1} parent=1 // loop_footer
      %s19 = sadd.s32 1, %s15
    $region7: #{tpu_custom_call.1} parent=1 // loop_footer_branch
      %14 = sbr.rel target = $region3
    $region8: #{tpu_custom_call.1} parent=1 // loop_exit
      _
    %497 = vsyncpa [#allocation3], 1
    %s498 = scalar_lea.sflag [#allocation3], 1
    %499 = vsyncpa %s498, 1
    %500 = vsyncpa [#allocation4], 1
    %s501 = scalar_lea.sflag [#allocation4], 1
    %502 = vsyncpa %s501, 1
    %503 = vsyncpa [#allocation5], 1
    %s504 = scalar_lea.sflag [#allocation5], 1
    %505 = vsyncpa %s504, 1

</llo_original>
